<compile_context>
chip_gen: v5e
topology: v5e:2x2
jax: 0.10.0
libtpu: 0.0.40
codegen_flags: <defaults>
</compile_context>

<pallas_src>
import functools

import jax
import jax.numpy as jnp
from jax import lax
from jax.experimental import pallas as pl
from jax.experimental.pallas import tpu as pltpu


def _round_up(x, m):
    return ((x + m - 1) // m) * m


def _gelu_exact(h):
    # erf-based GELU in f32 — matches torch.nn.GELU() default.
    return 0.5 * h * (1.0 + lax.erf(h * 0.7071067811865476))


def _ff_kernel_single(x_ref, w1_ref, b1_ref, w2_ref, b2_ref, o_ref, *, compute_dtype):
    """Whole hidden dim resident: 1-D grid over token tiles, no accumulator."""
    x = x_ref[...].astype(compute_dtype)
    h = jnp.dot(x, w1_ref[...].astype(compute_dtype), preferred_element_type=jnp.float32)
    h = _gelu_exact(h + b1_ref[...].astype(jnp.float32))
    out = jnp.dot(h.astype(compute_dtype), w2_ref[...].astype(compute_dtype),
                  preferred_element_type=jnp.float32)
    o_ref[...] = (out + b2_ref[...].astype(jnp.float32)).astype(o_ref.dtype)


def _ff_kernel_acc(x_ref, w1_ref, b1_ref, w2_ref, b2_ref, o_ref, acc_ref, *, compute_dtype):
    """Hidden dim tiled: 2-D grid (token tiles x hidden tiles), f32 VMEM accumulator."""
    j = pl.program_id(1)

    x = x_ref[...].astype(compute_dtype)
    h = jnp.dot(x, w1_ref[...].astype(compute_dtype), preferred_element_type=jnp.float32)
    h = _gelu_exact(h + b1_ref[...].astype(jnp.float32))
    partial = jnp.dot(h.astype(compute_dtype), w2_ref[...].astype(compute_dtype),
                      preferred_element_type=jnp.float32)

    @pl.when(j == 0)
    def _():
        # Fold the output bias into the accumulator init -> no zero-fill pass.
        acc_ref[...] = partial + b2_ref[...].astype(jnp.float32)

    @pl.when(j > 0)
    def _():
        acc_ref[...] += partial

    @pl.when(j == pl.num_programs(1) - 1)
    def _():
        o_ref[...] = acc_ref[...].astype(o_ref.dtype)


def _est_vmem_bytes(tm, dim, th, ix, iw, ox, with_acc):
    # Double-buffered pipeline blocks + intermediates.
    est = 2 * (tm * dim * ix       # x tile
               + dim * th * iw     # W1 tile
               + th * 4            # b1 tile
               + th * dim * iw     # W2 tile
               + dim * 4           # b2
               + tm * dim * ox)    # out tile
    est += 2 * tm * th * 4         # GELU / h intermediate + spill headroom
    if with_acc:
        est += tm * dim * 4        # f32 accumulator scratch
    return est


def feed_forward(x, w1, b1, w2, b2, *, tm=None, th=None, compute_dtype=jnp.bfloat16):
    """x: (B, N, dim); w1: (dim, hidden); b1: (hidden,); w2: (hidden, dim); b2: (dim,).

    Weights are stored (in, out), i.e. equivalent to PyTorch's x @ W.T + b.
    """
    B, N, dim = x.shape
    hidden = w1.shape[1]
    M = B * N

    ix = x.dtype.itemsize
    iw = w1.dtype.itemsize
    ox = x.dtype.itemsize

    # ---- token-axis tiling: big MXU-aligned tiles, pad the remainder ----
    if tm is None:
        tm = min(256, _round_up(M, 8))
    tm = max(8, _round_up(int(tm), 8))
    M_pad = _round_up(M, tm)

    # ---- hidden-axis (reduction) tiling: picked from an explicit VMEM budget ----
    budget = 40 << 20  # stay well inside v7x's 64 MiB per-TC VMEM
    if th is None:
        th = hidden
        while th > 256 and _est_vmem_bytes(tm, dim, _round_up(th, 128), ix, iw, ox,
                                           with_acc=(th < hidden)) > budget:
            th = _round_up(max(th // 2, 256), 128)
    if th >= hidden:
        th = hidden
        H_pad = hidden
    else:
        th = max(128, _round_up(int(th), 128))
        H_pad = _round_up(hidden, th)

    x2 = x.reshape(M, dim)
    if M_pad != M:
        x2 = jnp.pad(x2, ((0, M_pad - M), (0, 0)))

    if H_pad != hidden:
        # zero-padded hidden columns contribute exactly 0 to the output
        w1 = jnp.pad(w1, ((0, 0), (0, H_pad - hidden)))
        b1 = jnp.pad(b1, ((0, H_pad - hidden),))
        w2 = jnp.pad(w2, ((0, H_pad - hidden), (0, 0)))

    b1_2 = b1.reshape(1, H_pad)
    b2_2 = b2.reshape(1, dim)

    n_m = M_pad // tm
    n_h = H_pad // th
    single = (n_h == 1)

    est = _est_vmem_bytes(tm, dim, th, ix, iw, ox, with_acc=not single)
    vmem_limit = min(max(int(est * 1.5) + (4 << 20), 8 << 20), 64 << 20)

    out_shape = jax.ShapeDtypeStruct((M_pad, dim), x.dtype)

    if single:
        grid_spec = pltpu.PrefetchScalarGridSpec(
            num_scalar_prefetch=0,
            grid=(n_m,),
            in_specs=[
                pl.BlockSpec((tm, dim), lambda i: (i, 0)),      # x tile
                pl.BlockSpec((dim, H_pad), lambda i: (0, 0)),   # W1 (whole)
                pl.BlockSpec((1, H_pad), lambda i: (0, 0)),     # b1
                pl.BlockSpec((H_pad, dim), lambda i: (0, 0)),   # W2 (whole)
                pl.BlockSpec((1, dim), lambda i: (0, 0)),       # b2
            ],
            out_specs=pl.BlockSpec((tm, dim), lambda i: (i, 0)),
        )
        kernel = functools.partial(_ff_kernel_single, compute_dtype=compute_dtype)
        dim_sem = ("parallel",)
    else:
        grid_spec = pltpu.PrefetchScalarGridSpec(
            num_scalar_prefetch=0,
            grid=(n_m, n_h),
            in_specs=[
                pl.BlockSpec((tm, dim), lambda i, j: (i, 0)),   # x tile (re-used across j)
                pl.BlockSpec((dim, th), lambda i, j: (0, j)),   # W1 hidden tile
                pl.BlockSpec((1, th), lambda i, j: (0, j)),     # b1 hidden tile
                pl.BlockSpec((th, dim), lambda i, j: (j, 0)),   # W2 hidden tile
                pl.BlockSpec((1, dim), lambda i, j: (0, 0)),    # b2
            ],
            out_specs=pl.BlockSpec((tm, dim), lambda i, j: (i, 0)),
            scratch_shapes=[pltpu.VMEM((tm, dim), jnp.float32)],
        )
        kernel = functools.partial(_ff_kernel_acc, compute_dtype=compute_dtype)
        dim_sem = ("parallel", "arbitrary")

    out = pl.pallas_call(
        kernel,
        out_shape=out_shape,
        grid_spec=grid_spec,
        compiler_params=pltpu.CompilerParams(
            dimension_semantics=dim_sem,
            vmem_limit_bytes=vmem_limit,
        ),
    )(x2, w1, b1_2, w2, b2_2)

    return out[:M].reshape(B, N, dim)


def feed_forward_ref(x, w1, b1, w2, b2):
    h = jnp.einsum("bnd,dh->bnh", x, w1) + b1
    h = jax.nn.gelu(h, approximate=False)
    return jnp.einsum("bnh,hd->bnd", h, w2) + b2


if __name__ == "__main__":
    B, N, dim, hidden = 2, 16, 128, 256

    key = jax.random.PRNGKey(0)
    kx, kw1, kb1, kw2, kb2 = jax.random.split(key, 5)

    x = jax.random.normal(kx, (B, N, dim), dtype=jnp.float32)
    # Deterministic synthetic params (nn.Linear(dim, hidden) / nn.Linear(hidden, dim)),
    # stored in (in, out) layout for the kernel.
    w1 = jax.random.normal(kw1, (dim, hidden), dtype=jnp.float32) * 0.02
    b1 = jax.random.normal(kb1, (hidden,), dtype=jnp.float32) * 0.02
    w2 = jax.random.normal(kw2, (hidden, dim), dtype=jnp.float32) * 0.02
    b2 = jax.random.normal(kb2, (dim,), dtype=jnp.float32) * 0.02

    ref = feed_forward_ref(x, w1, b1, w2, b2)

    # Default path (single-pass kernel): bf16 MXU inputs, f32 accumulation.
    out = jax.block_until_ready(feed_forward(x, w1, b1, w2, b2))
    assert out.shape == (B, N, dim)
    assert jnp.allclose(out, ref, atol=2e-2, rtol=2e-2), float(jnp.max(jnp.abs(out - ref)))

    # Full-f32 compute path matches the reference tightly.
    out_f32 = jax.block_until_ready(
        feed_forward(x, w1, b1, w2, b2, compute_dtype=jnp.float32))
    assert jnp.allclose(out_f32, ref, atol=1e-5, rtol=1e-5)

    # Hidden-axis reduction tiling (2 grid steps over hidden -> accumulator kernel).
    out_th = jax.block_until_ready(feed_forward(x, w1, b1, w2, b2, th=128))
    assert jnp.allclose(out_th, ref, atol=2e-2, rtol=2e-2)

    # Ragged token count exercises the padded-M path with a large forced tile.
    x_r = jax.random.normal(kx, (2, 13, dim), dtype=jnp.float32)
    out_r = jax.block_until_ready(feed_forward(x_r, w1, b1, w2, b2, tm=256))
    ref_r = feed_forward_ref(x_r, w1, b1, w2, b2)
    assert jnp.allclose(out_r, ref_r, atol=2e-2, rtol=2e-2)

    print("KERNEL_OK")
</pallas_src>

<mosaic_0001>
module attributes {stable_mosaic.version = 11 : i64} {
  func.func @_ff_kernel_single(%arg0: i32, %arg1: memref<32x128xf32, #tpu.memory_space<vmem>>, %arg2: memref<128x256xf32, #tpu.memory_space<vmem>>, %arg3: memref<1x256xf32, #tpu.memory_space<vmem>>, %arg4: memref<256x128xf32, #tpu.memory_space<vmem>>, %arg5: memref<1x128xf32, #tpu.memory_space<vmem>>, %arg6: memref<32x128xf32, #tpu.memory_space<vmem>>) attributes {dimension_semantics = [#tpu.dimension_semantics<parallel>], iteration_bounds = array<i64: 1>, scalar_prefetch = 0 : i64, scratch_operands = 0 : i64, tpu.core_type = #tpu.core_type<tc>, window_params = [{transform_indices = @transform_0, window_bounds = array<i64: 32, 128>}, {pipeline_mode = #tpu.pipeline_mode<synchronous>, transform_indices = @transform_1, window_bounds = array<i64: 128, 256>}, {pipeline_mode = #tpu.pipeline_mode<synchronous>, transform_indices = @transform_2, window_bounds = array<i64: 1, 256>}, {pipeline_mode = #tpu.pipeline_mode<synchronous>, transform_indices = @transform_3, window_bounds = array<i64: 256, 128>}, {pipeline_mode = #tpu.pipeline_mode<synchronous>, transform_indices = @transform_4, window_bounds = array<i64: 1, 128>}, {transform_indices = @transform_5, window_bounds = array<i64: 32, 128>}]} {
    %c0 = arith.constant 0 : index
    %c0_0 = arith.constant 0 : index
    %0 = vector.load %arg1[%c0, %c0_0] : memref<32x128xf32, #tpu.memory_space<vmem>>, vector<32x128xf32>
    %1 = arith.truncf %0 : vector<32x128xf32> to vector<32x128xbf16>
    %c0_1 = arith.constant 0 : index
    %c0_2 = arith.constant 0 : index
    %2 = vector.load %arg2[%c0_1, %c0_2] : memref<128x256xf32, #tpu.memory_space<vmem>>, vector<128x256xf32>
    %3 = arith.truncf %2 : vector<128x256xf32> to vector<128x256xbf16>
    %cst = arith.constant dense<0.000000e+00> : vector<32x256xf32>
    %4 = tpu.matmul %1, %3, %cst {dimension_numbers = #tpu.dot_dimension_numbers<[1], [0], [0], [1], [0, 0, 1, 1], [], []>} : vector<32x128xbf16>, vector<128x256xbf16>, vector<32x256xf32> -> vector<32x256xf32>
    %c0_3 = arith.constant 0 : index
    %c0_4 = arith.constant 0 : index
    %5 = vector.load %arg3[%c0_3, %c0_4] : memref<1x256xf32, #tpu.memory_space<vmem>>, vector<1x256xf32>
    %6 = vector.broadcast %5 : vector<1x256xf32> to vector<32x256xf32>
    %7 = arith.addf %4, %6 : vector<32x256xf32>
    %cst_5 = arith.constant 5.000000e-01 : f32
    %8 = vector.broadcast %cst_5 : f32 to vector<32x256xf32>
    %9 = arith.mulf %8, %7 : vector<32x256xf32>
    %cst_6 = arith.constant 0.707106769 : f32
    %10 = vector.broadcast %cst_6 : f32 to vector<32x256xf32>
    %11 = arith.mulf %7, %10 : vector<32x256xf32>
    %12 = math.erf %11 : vector<32x256xf32>
    %cst_7 = arith.constant 1.000000e+00 : f32
    %13 = vector.broadcast %cst_7 : f32 to vector<32x256xf32>
    %14 = arith.addf %13, %12 : vector<32x256xf32>
    %15 = arith.mulf %9, %14 : vector<32x256xf32>
    %16 = arith.truncf %15 : vector<32x256xf32> to vector<32x256xbf16>
    %c0_8 = arith.constant 0 : index
    %c0_9 = arith.constant 0 : index
    %17 = vector.load %arg4[%c0_8, %c0_9] : memref<256x128xf32, #tpu.memory_space<vmem>>, vector<256x128xf32>
    %18 = arith.truncf %17 : vector<256x128xf32> to vector<256x128xbf16>
    %cst_10 = arith.constant dense<0.000000e+00> : vector<32x128xf32>
    %19 = tpu.matmul %16, %18, %cst_10 {dimension_numbers = #tpu.dot_dimension_numbers<[1], [0], [0], [1], [0, 0, 1, 1], [], []>} : vector<32x256xbf16>, vector<256x128xbf16>, vector<32x128xf32> -> vector<32x128xf32>
    %c0_11 = arith.constant 0 : index
    %c0_12 = arith.constant 0 : index
    %20 = vector.load %arg5[%c0_11, %c0_12] : memref<1x128xf32, #tpu.memory_space<vmem>>, vector<1x128xf32>
    %21 = vector.broadcast %20 : vector<1x128xf32> to vector<32x128xf32>
    %22 = arith.addf %19, %21 : vector<32x128xf32>
    %c0_13 = arith.constant 0 : index
    %c0_14 = arith.constant 0 : index
    %23 = vector.load %arg6[%c0_13, %c0_14] : memref<32x128xf32, #tpu.memory_space<vmem>>, vector<32x128xf32>
    tpu.vector_store %arg6[%c0_13, %c0_14], %22 {strides = array<i32>} : memref<32x128xf32, #tpu.memory_space<vmem>>, vector<32x128xf32>,
    return
  }
  func.func @transform_0(%arg0: i32) -> (i32, i32) {
    %c0_i32 = arith.constant 0 : i32
    %c0_i32_0 = arith.constant 0 : i32
    return %arg0, %c0_i32 : i32, i32
  }
  func.func @transform_1(%arg0: i32) -> (i32, i32) {
    %c0_i32 = arith.constant 0 : i32
    %c0_i32_0 = arith.constant 0 : i32
    %c0_i32_1 = arith.constant 0 : i32
    return %c0_i32, %c0_i32_0 : i32, i32
  }
  func.func @transform_2(%arg0: i32) -> (i32, i32) {
    %c0_i32 = arith.constant 0 : i32
    %c0_i32_0 = arith.constant 0 : i32
    %c0_i32_1 = arith.constant 0 : i32
    return %c0_i32, %c0_i32_0 : i32, i32
  }
  func.func @transform_3(%arg0: i32) -> (i32, i32) {
    %c0_i32 = arith.constant 0 : i32
    %c0_i32_0 = arith.constant 0 : i32
    %c0_i32_1 = arith.constant 0 : i32
    return %c0_i32, %c0_i32_0 : i32, i32
  }
  func.func @transform_4(%arg0: i32) -> (i32, i32) {
    %c0_i32 = arith.constant 0 : i32
    %c0_i32_0 = arith.constant 0 : i32
    %c0_i32_1 = arith.constant 0 : i32
    return %c0_i32, %c0_i32_0 : i32, i32
  }
  func.func @transform_5(%arg0: i32) -> (i32, i32) {
    %c0_i32 = arith.constant 0 : i32
    %c0_i32_0 = arith.constant 0 : i32
    return %arg0, %c0_i32 : i32, i32
  }
}

</mosaic_0001>

<llo_original>
// kernel: tpu_custom_call.1
$region0: #{tpu_custom_call.1}
  #allocation0 [shape = 'u32[]', space=smem, size = 0x4, offset = 0x4, fixed_abs, tag = 'smem constant byte address 0x4 - core index']
  #allocation1 [shape = 'u32[72,128]{1,0:T(1,128)}', space=vmem, size = 0x9000, scoped, tag = 'internal scratch']
  %s0 = inlined_call_operand.hbm [shape: f32[32,128], index: 0, kind: input, shape index: {}]
  %s1 = inlined_call_operand.hbm [shape: f32[128,256], index: 1, kind: input, shape index: {}]
  %s2 = inlined_call_operand.hbm [shape: f32[1,256], index: 2, kind: input, shape index: {}]
  %s3 = inlined_call_operand.hbm [shape: f32[256,128], index: 3, kind: input, shape index: {}]
  %s4 = inlined_call_operand.vmem [shape: f32[1,128], index: 4, kind: input, shape index: {}]
  %s5 = inlined_call_operand.hbm [shape: f32[32,128], index: 5, kind: output, shape index: {}]
  %s6 = sld [smem:[#allocation0]]
  $region46: #{tpu_custom_call.1} parent=0
    _
  %s8 = ssub.s32 1, %s6
  %s9 = scalar_select 0, %s8, %s6
  $region1: #{tpu_custom_call.1} parent=0
    #allocation2 [shape = 'u8[16384]{0}', space=vmem, size = 0x4000, scoped, tag = 'input window, operand 0, single buffered']
    #allocation3 [shape = 's32[1]{0}', space=sflag, size = 0x4, scoped, tag = 'scoped memory for tpu_custom_call.1']
    #allocation4 [shape = 's32[1]{0}', space=sflag, size = 0x4, scoped, tag = 'scoped memory for tpu_custom_call.1']
    #allocation5 [shape = 'u8[131072]{0}', space=vmem, size = 0x20000, scoped, tag = 'input window, operand 1, single buffered']
    #allocation6 [shape = 's32[1]{0}', space=sflag, size = 0x4, scoped, tag = 'scoped memory for tpu_custom_call.1']
    #allocation7 [shape = 'u8[1024]{0}', space=vmem, size = 0x400, scoped, tag = 'input window, operand 2, single buffered']
    #allocation8 [shape = 'u8[131072]{0}', space=vmem, size = 0x20000, scoped, tag = 'input window, operand 3, single buffered']
    #allocation9 [shape = 's32[1]{0}', space=sflag, size = 0x4, scoped, tag = 'scoped memory for tpu_custom_call.1']
    #allocation10 [shape = 'u8[16384]{0}', space=vmem, size = 0x4000, scoped, tag = 'output window, operand 0, single buffered']
    %10 = vsyncpa [#allocation3], 0
    %11 = vsyncpa [#allocation6], 0
    %12 = vsyncpa [#allocation9], 0
    %13 = vsyncpa [#allocation4], 0
    // Predicated region
    $region2: #{tpu_custom_call.1} parent=1 // pred_check
      _
    $region3: #{tpu_custom_call.1} parent=1 // pred_check_branch
      %15 = sbr.rel (0) target = $region5
    $region4: #{tpu_custom_call.1} parent=1 // pred_region
      %17 = vsyncadd [#allocation3], 0
      %s18 = sshll.u32 %s0, 4
      %s19 = int_to_ptr.hbm [resolvable:$true] %s18
      %s20 = sshll.u32 [#allocation2], 4
      %s21 = int_to_ptr.vmem [resolvable:$true] %s20
      %26 = dma.hbm_to_vmem [thread:$0]  %s19, 512, %s21, [#allocation3], 128, 128, 8
    $region5: #{tpu_custom_call.1} parent=1 // pred_fallthru
      _
    // Predicated region
    $region6: #{tpu_custom_call.1} parent=1 // pred_check
      _
    $region7: #{tpu_custom_call.1} parent=1 // pred_check_branch
      %28 = sbr.rel (0) target = $region9
    $region8: #{tpu_custom_call.1} parent=1 // pred_region
      %30 = vsyncadd [#allocation6], 0
      %s31 = sshll.u32 %s1, 4
      %s32 = int_to_ptr.hbm [resolvable:$true] %s31
      %s33 = sshll.u32 [#allocation5], 4
      %s34 = int_to_ptr.vmem [resolvable:$true] %s33
      %39 = dma.hbm_to_vmem [thread:$0]  %s32, 4096, %s34, [#allocation6], 256, 256, 16
    $region9: #{tpu_custom_call.1} parent=1 // pred_fallthru
      _
    // Predicated region
    $region10: #{tpu_custom_call.1} parent=1 // pred_check
      _
    $region11: #{tpu_custom_call.1} parent=1 // pred_check_branch
      %41 = sbr.rel (0) target = $region13
    $region12: #{tpu_custom_call.1} parent=1 // pred_region
      %43 = vsyncadd [#allocation6], 0
      %s45 = sshll.u32 %s2, 4
      %s46 = int_to_ptr.hbm [resolvable:$true] %s45
      %s47 = sshll.u32 [#allocation7], 4
      %s48 = int_to_ptr.vmem [resolvable:$true] %s47
      %50 = dma.hbm_to_vmem [thread:$0]  %s46, 32, %s48, [#allocation6]
    $region13: #{tpu_custom_call.1} parent=1 // pred_fallthru
      _
    // Predicated region
    $region14: #{tpu_custom_call.1} parent=1 // pred_check
      _
    $region15: #{tpu_custom_call.1} parent=1 // pred_check_branch
      %52 = sbr.rel (0) target = $region17
    $region16: #{tpu_custom_call.1} parent=1 // pred_region
      %54 = vsyncadd [#allocation9], 0
      %s55 = sshll.u32 %s3, 4
      %s56 = int_to_ptr.hbm [resolvable:$true] %s55
      %s57 = sshll.u32 [#allocation8], 4
      %s58 = int_to_ptr.vmem [resolvable:$true] %s57
      %63 = dma.hbm_to_vmem [thread:$0]  %s56, 4096, %s58, [#allocation9], 128, 128, 8
    $region17: #{tpu_custom_call.1} parent=1 // pred_fallthru
      _
    // Predicated region
    $region18: #{tpu_custom_call.1} parent=1 // pred_check
      _
    $region19: #{tpu_custom_call.1} parent=1 // pred_check_branch
      %65 = sbr.rel (0) target = $region21
    $region20: #{tpu_custom_call.1} parent=1 // pred_region
      _
    $region21: #{tpu_custom_call.1} parent=1 // pred_fallthru
      _
    // Predicated region
    $region22: #{tpu_custom_call.1} parent=1 // pred_check
      _
    $region23: #{tpu_custom_call.1} parent=1 // pred_check_branch
      %67 = sbr.rel (0) target = $region25
    $region24: #{tpu_custom_call.1} parent=1 // pred_region
      %69 = dma.done [#allocation3], 512
    $region25: #{tpu_custom_call.1} parent=1 // pred_fallthru
      _
    // Predicated region
    $region26: #{tpu_custom_call.1} parent=1 // pred_check
      _
    $region27: #{tpu_custom_call.1} parent=1 // pred_check_branch
      %71 = sbr.rel (0) target = $region29
    $region28: #{tpu_custom_call.1} parent=1 // pred_region
      %73 = dma.done [#allocation6], 4096
    $region29: #{tpu_custom_call.1} parent=1 // pred_fallthru
      _
    // Predicated region
    $region30: #{tpu_custom_call.1} parent=1 // pred_check
      _
    $region31: #{tpu_custom_call.1} parent=1 // pred_check_branch
      %75 = sbr.rel (0) target = $region33
    $region32: #{tpu_custom_call.1} parent=1 // pred_region
      %77 = dma.done [#allocation6], 32
    $region33: #{tpu_custom_call.1} parent=1 // pred_fallthru
      _
    // Predicated region
    $region34: #{tpu_custom_call.1} parent=1 // pred_check
      _
    $region35: #{tpu_custom_call.1} parent=1 // pred_check_branch
      %79 = sbr.rel (0) target = $region37
    $region36: #{tpu_custom_call.1} parent=1 // pred_region
      %81 = dma.done [#allocation9], 4096
    $region37: #{tpu_custom_call.1} parent=1 // pred_fallthru
      _
    %v82 = vld [vmem:[#allocation2] sm:$0xff]
    %v83 = vld [vmem:[#allocation2 + $0x8] sm:$0xff]
    %v84 = vld [vmem:[#allocation2 + $0x10] sm:$0xff]
    %v85 = vld [vmem:[#allocation2 + $0x18] sm:$0xff]
    %v86 = vpack.c.bf16 %v83, %v82
    %v87 = vpack.c.bf16 %v85, %v84
    %v88 = vld [vmem:[#allocation5] sm:$0xff]
    %v89 = vld [vmem:[#allocation5 + $0x8] sm:$0xff]
    %v90 = vld [vmem:[#allocation5 + $0x10] sm:$0xff]
    %v91 = vld [vmem:[#allocation5 + $0x18] sm:$0xff]
    %v92 = vld [vmem:[#allocation5 + $0x20] sm:$0xff]
    %v93 = vld [vmem:[#allocation5 + $0x28] sm:$0xff]
    %v94 = vld [vmem:[#allocation5 + $0x30] sm:$0xff]
    %v95 = vld [vmem:[#allocation5 + $0x38] sm:$0xff]
    %v96 = vld [vmem:[#allocation5 + $0x40] sm:$0xff]
    %v97 = vld [vmem:[#allocation5 + $0x48] sm:$0xff]
    %v98 = vld [vmem:[#allocation5 + $0x50] sm:$0xff]
    %v99 = vld [vmem:[#allocation5 + $0x58] sm:$0xff]
    %v100 = vld [vmem:[#allocation5 + $0x60] sm:$0xff]
    %v101 = vld [vmem:[#allocation5 + $0x68] sm:$0xff]
    %v102 = vld [vmem:[#allocation5 + $0x70] sm:$0xff]
    %v103 = vld [vmem:[#allocation5 + $0x78] sm:$0xff]
    %v104 = vld [vmem:[#allocation5 + $0x80] sm:$0xff]
    %v105 = vld [vmem:[#allocation5 + $0x88] sm:$0xff]
    %v106 = vld [vmem:[#allocation5 + $0x90] sm:$0xff]
    %v107 = vld [vmem:[#allocation5 + $0x98] sm:$0xff]
    %v108 = vld [vmem:[#allocation5 + $0xa0] sm:$0xff]
    %v109 = vld [vmem:[#allocation5 + $0xa8] sm:$0xff]
    %v110 = vld [vmem:[#allocation5 + $0xb0] sm:$0xff]
    %v111 = vld [vmem:[#allocation5 + $0xb8] sm:$0xff]
    %v112 = vld [vmem:[#allocation5 + $0xc0] sm:$0xff]
    %v113 = vld [vmem:[#allocation5 + $0xc8] sm:$0xff]
    %v114 = vld [vmem:[#allocation5 + $0xd0] sm:$0xff]
    %v115 = vld [vmem:[#allocation5 + $0xd8] sm:$0xff]
    %v116 = vld [vmem:[#allocation5 + $0xe0] sm:$0xff]
    %v117 = vld [vmem:[#allocation5 + $0xe8] sm:$0xff]
    %v118 = vld [vmem:[#allocation5 + $0xf0] sm:$0xff]
    %v119 = vld [vmem:[#allocation5 + $0xf8] sm:$0xff]
    %v120 = vpack.c.bf16 %v90, %v88
    %v121 = vpack.c.bf16 %v91, %v89
    %v122 = vpack.c.bf16 %v94, %v92
    %v123 = vpack.c.bf16 %v95, %v93
    %v124 = vpack.c.bf16 %v98, %v96
    %v125 = vpack.c.bf16 %v99, %v97
    %v126 = vpack.c.bf16 %v102, %v100
    %v127 = vpack.c.bf16 %v103, %v101
    %v128 = vpack.c.bf16 %v106, %v104
    %v129 = vpack.c.bf16 %v107, %v105
    %v130 = vpack.c.bf16 %v110, %v108
    %v131 = vpack.c.bf16 %v111, %v109
    %v132 = vpack.c.bf16 %v114, %v112
    %v133 = vpack.c.bf16 %v115, %v113
    %v134 = vpack.c.bf16 %v118, %v116
    %v135 = vpack.c.bf16 %v119, %v117
    %v136 = vld [vmem:[#allocation7] sm:$0x3]
    %v138 = vperm.slane %v136, 0
    %v139 = vperm.slane %v136, 1
    %142 = vmatpush.bf16.msra.mxu0 %v134
    %143 = vmatpush.bf16.msra.mxu0 %v132
    %144 = vmatpush.bf16.msra.mxu0 %v130
    %145 = vmatpush.bf16.msra.mxu0 %v128
    %146 = vmatpush.bf16.msra.mxu0 %v126
    %147 = vmatpush.bf16.msra.mxu0 %v124
    %148 = vmatpush.bf16.msra.mxu0 %v122
    %149 = vmatpush.bf16.msra.mxu0 %v120
    %150 = vmatmul.bf16.gmra.mxu0 %v86
    %v151 = vpop.f32.mrf.mxu0
    %v152 = vadd.f32 %v138, %v151
    %v153 = vpop.f32.mrf.mxu0
    %v154 = vadd.f32 %v138, %v153
    %155 = vmatmul.bf16.gmra.mxu0 %v87
    %v156 = vpop.f32.mrf.mxu0
    %v157 = vadd.f32 %v138, %v156
    %v158 = vpop.f32.mrf.mxu0
    %v159 = vadd.f32 %v138, %v158
    %160 = vdwg.mxu0
    %161 = vmatpush.bf16.msra.mxu0 %v135
    %162 = vmatpush.bf16.msra.mxu0 %v133
    %163 = vmatpush.bf16.msra.mxu0 %v131
    %164 = vmatpush.bf16.msra.mxu0 %v129
    %165 = vmatpush.bf16.msra.mxu0 %v127
    %166 = vmatpush.bf16.msra.mxu0 %v125
    %167 = vmatpush.bf16.msra.mxu0 %v123
    %168 = vmatpush.bf16.msra.mxu0 %v121
    %169 = vmatmul.bf16.gmra.mxu0 %v86
    %v170 = vpop.f32.mrf.mxu0
    %v171 = vadd.f32 %v139, %v170
    %v172 = vpop.f32.mrf.mxu0
    %v173 = vadd.f32 %v139, %v172
    %174 = vmatmul.bf16.gmra.mxu0 %v87
    %v175 = vpop.f32.mrf.mxu0
    %v176 = vadd.f32 %v139, %v175
    %v177 = vpop.f32.mrf.mxu0
    %v178 = vadd.f32 %v139, %v177
    %179 = vdwg.mxu0
    %v180 = vmul.f32 %v152, 0.5
    %v181 = vmul.f32 %v171, 0.5
    %v182 = vmul.f32 %v154, 0.5
    %v183 = vmul.f32 %v173, 0.5
    %v184 = vmul.f32 %v157, 0.5
    %v185 = vmul.f32 %v176, 0.5
    %v186 = vmul.f32 %v159, 0.5
    %v187 = vmul.f32 %v178, 0.5
    %v188 = vmul.f32 %v152, 0.70710677
    %v189 = vmul.f32 %v171, 0.70710677
    %v190 = vmul.f32 %v154, 0.70710677
    %v191 = vmul.f32 %v173, 0.70710677
    %v192 = vmul.f32 %v157, 0.70710677
    %v193 = vmul.f32 %v176, 0.70710677
    %v194 = vmul.f32 %v159, 0.70710677
    %v195 = vmul.f32 %v178, 0.70710677
    %v196 = vmul.f32 %v188, %v188
    %v197 = vmin.f32 16.0, %v196
    %v198 = vmul.f32 %v197, 2.1237322e-06
    %v199 = vadd.f32 %v198, 0.00028619796
    %v200 = vmul.f32 %v197, %v199
    %v201 = vadd.f32 %v200, 0.0036580483
    %v202 = vmul.f32 %v197, %v201
    %v203 = vadd.f32 %v202, 0.05243302
    %v204 = vmul.f32 %v197, %v203
    %v205 = vadd.f32 %v204, 0.18741608
    %v206 = vmul.f32 %v197, %v205
    %v207 = vadd.f32 %v206, 1.1283791
    %v208 = vmul.f32 %v188, %v207
    %v209 = vmul.f32 %v197, 3.8918573e-05
    %v210 = vadd.f32 %v209, 0.001143296
    %v211 = vmul.f32 %v197, %v210
    %v212 = vadd.f32 %v211, 0.014752088
    %v213 = vmul.f32 %v197, %v212
    %v214 = vadd.f32 %v213, 0.112945676
    %v215 = vmul.f32 %v197, %v214
    %v216 = vadd.f32 %v215, 0.4994258
    %v217 = vmul.f32 %v197, %v216
    %v218 = vadd.f32 %v217, 1.0
    %v219 = vrcp.pop %v218
    %v220 = vmul.f32 %v218, %v219
    %v221 = vsub.f32 1.0, %v220
    %v222 = vmul.f32 %v219, %v221
    %v223 = vadd.f32 %v219, %v222
    %vm224 = vweird.f32 %v218
    %vm225 = vweird.f32 %v219
    %vm226 = vmor %vm224, %vm225
    %v227 = vsel %vm226, %v219, %v223
    %v228 = vand.u32 2147483647, %v218
    %vm229 = vcmp.eq.f32.partialorder %v228, 8.507059e+37
    %v230 = vand.u32 %v218, 2147483648
    %v231 = vor.u32 1.1754944e-38, %v230
    %v232 = vsel %vm229, %v231, %v227
    %v233 = vmul.f32 %v208, %v232
    %v234 = vmin.f32 %v233, 1.0
    %v235 = vmax.f32 %v234, -1.0
    %v236 = vmul.f32 %v189, %v189
    %v237 = vmin.f32 16.0, %v236
    %v238 = vmul.f32 %v237, 2.1237322e-06
    %v239 = vadd.f32 %v238, 0.00028619796
    %v240 = vmul.f32 %v237, %v239
    %v241 = vadd.f32 %v240, 0.0036580483
    %v242 = vmul.f32 %v237, %v241
    %v243 = vadd.f32 %v242, 0.05243302
    %v244 = vmul.f32 %v237, %v243
    %v245 = vadd.f32 %v244, 0.18741608
    %v246 = vmul.f32 %v237, %v245
    %v247 = vadd.f32 %v246, 1.1283791
    %v248 = vmul.f32 %v189, %v247
    %v249 = vmul.f32 %v237, 3.8918573e-05
    %v250 = vadd.f32 %v249, 0.001143296
    %v251 = vmul.f32 %v237, %v250
    %v252 = vadd.f32 %v251, 0.014752088
    %v253 = vmul.f32 %v237, %v252
    %v254 = vadd.f32 %v253, 0.112945676
    %v255 = vmul.f32 %v237, %v254
    %v256 = vadd.f32 %v255, 0.4994258
    %v257 = vmul.f32 %v237, %v256
    %v258 = vadd.f32 %v257, 1.0
    %v259 = vrcp.pop %v258
    %v260 = vmul.f32 %v258, %v259
    %v261 = vsub.f32 1.0, %v260
    %v262 = vmul.f32 %v259, %v261
    %v263 = vadd.f32 %v259, %v262
    %vm264 = vweird.f32 %v258
    %vm265 = vweird.f32 %v259
    %vm266 = vmor %vm264, %vm265
    %v267 = vsel %vm266, %v259, %v263
    %v268 = vand.u32 2147483647, %v258
    %vm269 = vcmp.eq.f32.partialorder %v268, 8.507059e+37
    %v270 = vand.u32 %v258, 2147483648
    %v271 = vor.u32 1.1754944e-38, %v270
    %v272 = vsel %vm269, %v271, %v267
    %v273 = vmul.f32 %v248, %v272
    %v274 = vmin.f32 %v273, 1.0
    %v275 = vmax.f32 %v274, -1.0
    %v276 = vmul.f32 %v190, %v190
    %v277 = vmin.f32 16.0, %v276
    %v278 = vmul.f32 %v277, 2.1237322e-06
    %v279 = vadd.f32 %v278, 0.00028619796
    %v280 = vmul.f32 %v277, %v279
    %v281 = vadd.f32 %v280, 0.0036580483
    %v282 = vmul.f32 %v277, %v281
    %v283 = vadd.f32 %v282, 0.05243302
    %v284 = vmul.f32 %v277, %v283
    %v285 = vadd.f32 %v284, 0.18741608
    %v286 = vmul.f32 %v277, %v285
    %v287 = vadd.f32 %v286, 1.1283791
    %v288 = vmul.f32 %v190, %v287
    %v289 = vmul.f32 %v277, 3.8918573e-05
    %v290 = vadd.f32 %v289, 0.001143296
    %v291 = vmul.f32 %v277, %v290
    %v292 = vadd.f32 %v291, 0.014752088
    %v293 = vmul.f32 %v277, %v292
    %v294 = vadd.f32 %v293, 0.112945676
    %v295 = vmul.f32 %v277, %v294
    %v296 = vadd.f32 %v295, 0.4994258
    %v297 = vmul.f32 %v277, %v296
    %v298 = vadd.f32 %v297, 1.0
    %v299 = vrcp.pop %v298
    %v300 = vmul.f32 %v298, %v299
    %v301 = vsub.f32 1.0, %v300
    %v302 = vmul.f32 %v299, %v301
    %v303 = vadd.f32 %v299, %v302
    %vm304 = vweird.f32 %v298
    %vm305 = vweird.f32 %v299
    %vm306 = vmor %vm304, %vm305
    %v307 = vsel %vm306, %v299, %v303
    %v308 = vand.u32 2147483647, %v298
    %vm309 = vcmp.eq.f32.partialorder %v308, 8.507059e+37
    %v310 = vand.u32 %v298, 2147483648
    %v311 = vor.u32 1.1754944e-38, %v310
    %v312 = vsel %vm309, %v311, %v307
    %v313 = vmul.f32 %v288, %v312
    %v314 = vmin.f32 %v313, 1.0
    %v315 = vmax.f32 %v314, -1.0
    %v316 = vmul.f32 %v191, %v191
    %v317 = vmin.f32 16.0, %v316
    %v318 = vmul.f32 %v317, 2.1237322e-06
    %v319 = vadd.f32 %v318, 0.00028619796
    %v320 = vmul.f32 %v317, %v319
    %v321 = vadd.f32 %v320, 0.0036580483
    %v322 = vmul.f32 %v317, %v321
    %v323 = vadd.f32 %v322, 0.05243302
    %v324 = vmul.f32 %v317, %v323
    %v325 = vadd.f32 %v324, 0.18741608
    %v326 = vmul.f32 %v317, %v325
    %v327 = vadd.f32 %v326, 1.1283791
    %v328 = vmul.f32 %v191, %v327
    %v329 = vmul.f32 %v317, 3.8918573e-05
    %v330 = vadd.f32 %v329, 0.001143296
    %v331 = vmul.f32 %v317, %v330
    %v332 = vadd.f32 %v331, 0.014752088
    %v333 = vmul.f32 %v317, %v332
    %v334 = vadd.f32 %v333, 0.112945676
    %v335 = vmul.f32 %v317, %v334
    %v336 = vadd.f32 %v335, 0.4994258
    %v337 = vmul.f32 %v317, %v336
    %v338 = vadd.f32 %v337, 1.0
    %v339 = vrcp.pop %v338
    %v340 = vmul.f32 %v338, %v339
    %v341 = vsub.f32 1.0, %v340
    %v342 = vmul.f32 %v339, %v341
    %v343 = vadd.f32 %v339, %v342
    %vm344 = vweird.f32 %v338
    %vm345 = vweird.f32 %v339
    %vm346 = vmor %vm344, %vm345
    %v347 = vsel %vm346, %v339, %v343
    %v348 = vand.u32 2147483647, %v338
    %vm349 = vcmp.eq.f32.partialorder %v348, 8.507059e+37
    %v350 = vand.u32 %v338, 2147483648
    %v351 = vor.u32 1.1754944e-38, %v350
    %v352 = vsel %vm349, %v351, %v347
    %v353 = vmul.f32 %v328, %v352
    %v354 = vmin.f32 %v353, 1.0
    %v355 = vmax.f32 %v354, -1.0
    %v356 = vmul.f32 %v192, %v192
    %v357 = vmin.f32 16.0, %v356
    %v358 = vmul.f32 %v357, 2.1237322e-06
    %v359 = vadd.f32 %v358, 0.00028619796
    %v360 = vmul.f32 %v357, %v359
    %v361 = vadd.f32 %v360, 0.0036580483
    %v362 = vmul.f32 %v357, %v361
    %v363 = vadd.f32 %v362, 0.05243302
    %v364 = vmul.f32 %v357, %v363
    %v365 = vadd.f32 %v364, 0.18741608
    %v366 = vmul.f32 %v357, %v365
    %v367 = vadd.f32 %v366, 1.1283791
    %v368 = vmul.f32 %v192, %v367
    %v369 = vmul.f32 %v357, 3.8918573e-05
    %v370 = vadd.f32 %v369, 0.001143296
    %v371 = vmul.f32 %v357, %v370
    %v372 = vadd.f32 %v371, 0.014752088
    %v373 = vmul.f32 %v357, %v372
    %v374 = vadd.f32 %v373, 0.112945676
    %v375 = vmul.f32 %v357, %v374
    %v376 = vadd.f32 %v375, 0.4994258
    %v377 = vmul.f32 %v357, %v376
    %v378 = vadd.f32 %v377, 1.0
    %v379 = vrcp.pop %v378
    %v380 = vmul.f32 %v378, %v379
    %v381 = vsub.f32 1.0, %v380
    %v382 = vmul.f32 %v379, %v381
    %v383 = vadd.f32 %v379, %v382
    %vm384 = vweird.f32 %v378
    %vm385 = vweird.f32 %v379
    %vm386 = vmor %vm384, %vm385
    %v387 = vsel %vm386, %v379, %v383
    %v388 = vand.u32 2147483647, %v378
    %vm389 = vcmp.eq.f32.partialorder %v388, 8.507059e+37
    %v390 = vand.u32 %v378, 2147483648
    %v391 = vor.u32 1.1754944e-38, %v390
    %v392 = vsel %vm389, %v391, %v387
    %v393 = vmul.f32 %v368, %v392
    %v394 = vmin.f32 %v393, 1.0
    %v395 = vmax.f32 %v394, -1.0
    %v396 = vmul.f32 %v193, %v193
    %v397 = vmin.f32 16.0, %v396
    %v398 = vmul.f32 %v397, 2.1237322e-06
    %v399 = vadd.f32 %v398, 0.00028619796
    %v400 = vmul.f32 %v397, %v399
    %v401 = vadd.f32 %v400, 0.0036580483
    %v402 = vmul.f32 %v397, %v401
    %v403 = vadd.f32 %v402, 0.05243302
    %v404 = vmul.f32 %v397, %v403
    %v405 = vadd.f32 %v404, 0.18741608
    %v406 = vmul.f32 %v397, %v405
    %v407 = vadd.f32 %v406, 1.1283791
    %v408 = vmul.f32 %v193, %v407
    %v409 = vmul.f32 %v397, 3.8918573e-05
    %v410 = vadd.f32 %v409, 0.001143296
    %v411 = vmul.f32 %v397, %v410
    %v412 = vadd.f32 %v411, 0.014752088
    %v413 = vmul.f32 %v397, %v412
    %v414 = vadd.f32 %v413, 0.112945676
    %v415 = vmul.f32 %v397, %v414
    %v416 = vadd.f32 %v415, 0.4994258
    %v417 = vmul.f32 %v397, %v416
    %v418 = vadd.f32 %v417, 1.0
    %v419 = vrcp.pop %v418
    %v420 = vmul.f32 %v418, %v419
    %v421 = vsub.f32 1.0, %v420
    %v422 = vmul.f32 %v419, %v421
    %v423 = vadd.f32 %v419, %v422
    %vm424 = vweird.f32 %v418
    %vm425 = vweird.f32 %v419
    %vm426 = vmor %vm424, %vm425
    %v427 = vsel %vm426, %v419, %v423
    %v428 = vand.u32 2147483647, %v418
    %vm429 = vcmp.eq.f32.partialorder %v428, 8.507059e+37
    %v430 = vand.u32 %v418, 2147483648
    %v431 = vor.u32 1.1754944e-38, %v430
    %v432 = vsel %vm429, %v431, %v427
    %v433 = vmul.f32 %v408, %v432
    %v434 = vmin.f32 %v433, 1.0
    %v435 = vmax.f32 %v434, -1.0
    %v436 = vmul.f32 %v194, %v194
    %v437 = vmin.f32 16.0, %v436
    %v438 = vmul.f32 %v437, 2.1237322e-06
    %v439 = vadd.f32 %v438, 0.00028619796
    %v440 = vmul.f32 %v437, %v439
    %v441 = vadd.f32 %v440, 0.0036580483
    %v442 = vmul.f32 %v437, %v441
    %v443 = vadd.f32 %v442, 0.05243302
    %v444 = vmul.f32 %v437, %v443
    %v445 = vadd.f32 %v444, 0.18741608
    %v446 = vmul.f32 %v437, %v445
    %v447 = vadd.f32 %v446, 1.1283791
    %v448 = vmul.f32 %v194, %v447
    %v449 = vmul.f32 %v437, 3.8918573e-05
    %v450 = vadd.f32 %v449, 0.001143296
    %v451 = vmul.f32 %v437, %v450
    %v452 = vadd.f32 %v451, 0.014752088
    %v453 = vmul.f32 %v437, %v452
    %v454 = vadd.f32 %v453, 0.112945676
    %v455 = vmul.f32 %v437, %v454
    %v456 = vadd.f32 %v455, 0.4994258
    %v457 = vmul.f32 %v437, %v456
    %v458 = vadd.f32 %v457, 1.0
    %v459 = vrcp.pop %v458
    %v460 = vmul.f32 %v458, %v459
    %v461 = vsub.f32 1.0, %v460
    %v462 = vmul.f32 %v459, %v461
    %v463 = vadd.f32 %v459, %v462
    %vm464 = vweird.f32 %v458
    %vm465 = vweird.f32 %v459
    %vm466 = vmor %vm464, %vm465
    %v467 = vsel %vm466, %v459, %v463
    %v468 = vand.u32 2147483647, %v458
    %vm469 = vcmp.eq.f32.partialorder %v468, 8.507059e+37
    %v470 = vand.u32 %v458, 2147483648
    %v471 = vor.u32 1.1754944e-38, %v470
    %v472 = vsel %vm469, %v471, %v467
    %v473 = vmul.f32 %v448, %v472
    %v474 = vmin.f32 %v473, 1.0
    %v475 = vmax.f32 %v474, -1.0
    %v476 = vmul.f32 %v195, %v195
    %v477 = vmin.f32 16.0, %v476
    %v478 = vmul.f32 %v477, 2.1237322e-06
    %v479 = vadd.f32 %v478, 0.00028619796
    %v480 = vmul.f32 %v477, %v479
    %v481 = vadd.f32 %v480, 0.0036580483
    %v482 = vmul.f32 %v477, %v481
    %v483 = vadd.f32 %v482, 0.05243302
    %v484 = vmul.f32 %v477, %v483
    %v485 = vadd.f32 %v484, 0.18741608
    %v486 = vmul.f32 %v477, %v485
    %v487 = vadd.f32 %v486, 1.1283791
    %v488 = vmul.f32 %v195, %v487
    %v489 = vmul.f32 %v477, 3.8918573e-05
    %v490 = vadd.f32 %v489, 0.001143296
    %v491 = vmul.f32 %v477, %v490
    %v492 = vadd.f32 %v491, 0.014752088
    %v493 = vmul.f32 %v477, %v492
    %v494 = vadd.f32 %v493, 0.112945676
    %v495 = vmul.f32 %v477, %v494
    %v496 = vadd.f32 %v495, 0.4994258
    %v497 = vmul.f32 %v477, %v496
    %v498 = vadd.f32 %v497, 1.0
    %v499 = vrcp.pop %v498
    %v500 = vmul.f32 %v498, %v499
    %v501 = vsub.f32 1.0, %v500
    %v502 = vmul.f32 %v499, %v501
    %v503 = vadd.f32 %v499, %v502
    %vm504 = vweird.f32 %v498
    %vm505 = vweird.f32 %v499
    %vm506 = vmor %vm504, %vm505
    %v507 = vsel %vm506, %v499, %v503
    %v508 = vand.u32 2147483647, %v498
    %vm509 = vcmp.eq.f32.partialorder %v508, 8.507059e+37
    %v510 = vand.u32 %v498, 2147483648
    %v511 = vor.u32 1.1754944e-38, %v510
    %v512 = vsel %vm509, %v511, %v507
    %v513 = vmul.f32 %v488, %v512
    %v514 = vmin.f32 %v513, 1.0
    %v515 = vmax.f32 %v514, -1.0
    %v516 = vadd.f32 %v235, 1.0
    %v517 = vadd.f32 %v275, 1.0
    %v518 = vadd.f32 %v315, 1.0
    %v519 = vadd.f32 %v355, 1.0
    %v520 = vadd.f32 %v395, 1.0
    %v521 = vadd.f32 %v435, 1.0
    %v522 = vadd.f32 %v475, 1.0
    %v523 = vadd.f32 %v515, 1.0
    %v524 = vmul.f32 %v180, %v516
    %v525 = vmul.f32 %v181, %v517
    %v526 = vmul.f32 %v182, %v518
    %v527 = vmul.f32 %v183, %v519
    %v528 = vmul.f32 %v184, %v520
    %v529 = vmul.f32 %v185, %v521
    %v530 = vmul.f32 %v186, %v522
    %v531 = vmul.f32 %v187, %v523
    %v532 = vpack.c.bf16 %v526, %v524
    %v533 = vpack.c.bf16 %v527, %v525
    %v534 = vpack.c.bf16 %v530, %v528
    %v535 = vpack.c.bf16 %v531, %v529
    %v536 = vld [vmem:[#allocation8] sm:$0xff]
    %v537 = vld [vmem:[#allocation8 + $0x8] sm:$0xff]
    %v538 = vld [vmem:[#allocation8 + $0x10] sm:$0xff]
    %v539 = vld [vmem:[#allocation8 + $0x18] sm:$0xff]
    %v540 = vld [vmem:[#allocation8 + $0x20] sm:$0xff]
    %v541 = vld [vmem:[#allocation8 + $0x28] sm:$0xff]
    %v542 = vld [vmem:[#allocation8 + $0x30] sm:$0xff]
    %v543 = vld [vmem:[#allocation8 + $0x38] sm:$0xff]
    %v544 = vld [vmem:[#allocation8 + $0x40] sm:$0xff]
    %v545 = vld [vmem:[#allocation8 + $0x48] sm:$0xff]
    %v546 = vld [vmem:[#allocation8 + $0x50] sm:$0xff]
    %v547 = vld [vmem:[#allocation8 + $0x58] sm:$0xff]
    %v548 = vld [vmem:[#allocation8 + $0x60] sm:$0xff]
    %v549 = vld [vmem:[#allocation8 + $0x68] sm:$0xff]
    %v550 = vld [vmem:[#allocation8 + $0x70] sm:$0xff]
    %v551 = vld [vmem:[#allocation8 + $0x78] sm:$0xff]
    %v552 = vld [vmem:[#allocation8 + $0x80] sm:$0xff]
    %v553 = vld [vmem:[#allocation8 + $0x88] sm:$0xff]
    %v554 = vld [vmem:[#allocation8 + $0x90] sm:$0xff]
    %v555 = vld [vmem:[#allocation8 + $0x98] sm:$0xff]
    %v556 = vld [vmem:[#allocation8 + $0xa0] sm:$0xff]
    %v557 = vld [vmem:[#allocation8 + $0xa8] sm:$0xff]
    %v558 = vld [vmem:[#allocation8 + $0xb0] sm:$0xff]
    %v559 = vld [vmem:[#allocation8 + $0xb8] sm:$0xff]
    %v560 = vld [vmem:[#allocation8 + $0xc0] sm:$0xff]
    %v561 = vld [vmem:[#allocation8 + $0xc8] sm:$0xff]
    %v562 = vld [vmem:[#allocation8 + $0xd0] sm:$0xff]
    %v563 = vld [vmem:[#allocation8 + $0xd8] sm:$0xff]
    %v564 = vld [vmem:[#allocation8 + $0xe0] sm:$0xff]
    %v565 = vld [vmem:[#allocation8 + $0xe8] sm:$0xff]
    %v566 = vld [vmem:[#allocation8 + $0xf0] sm:$0xff]
    %v567 = vld [vmem:[#allocation8 + $0xf8] sm:$0xff]
    %v568 = vpack.c.bf16 %v537, %v536
    %v569 = vpack.c.bf16 %v539, %v538
    %v570 = vpack.c.bf16 %v541, %v540
    %v571 = vpack.c.bf16 %v543, %v542
    %v572 = vpack.c.bf16 %v545, %v544
    %v573 = vpack.c.bf16 %v547, %v546
    %v574 = vpack.c.bf16 %v549, %v548
    %v575 = vpack.c.bf16 %v551, %v550
    %v576 = vpack.c.bf16 %v553, %v552
    %v577 = vpack.c.bf16 %v555, %v554
    %v578 = vpack.c.bf16 %v557, %v556
    %v579 = vpack.c.bf16 %v559, %v558
    %v580 = vpack.c.bf16 %v561, %v560
    %v581 = vpack.c.bf16 %v563, %v562
    %v582 = vpack.c.bf16 %v565, %v564
    %v583 = vpack.c.bf16 %v567, %v566
    %v584 = vld [vmem:[%s4] sm:$0x1]
    %v586 = vperm.slane %v584, 0
    %588 = vmatpush.bf16.msra.mxu0 %v575
    %589 = vmatpush.bf16.msra.mxu0 %v574
    %590 = vmatpush.bf16.msra.mxu0 %v573
    %591 = vmatpush.bf16.msra.mxu0 %v572
    %592 = vmatpush.bf16.msra.mxu0 %v571
    %593 = vmatpush.bf16.msra.mxu0 %v570
    %594 = vmatpush.bf16.msra.mxu0 %v569
    %595 = vmatpush.bf16.msra.mxu0 %v568
    %596 = vmatmul.bf16.gmra.mxu0 %v532
    %v597 = vpop.f32.mrf.mxu0
    %v598 = vadd.f32 %v586, %v597
    %v599 = vpop.f32.mrf.mxu0
    %v600 = vadd.f32 %v586, %v599
    %601 = vmatmul.bf16.gmra.mxu0 %v534
    %v602 = vpop.f32.mrf.mxu0
    %v603 = vadd.f32 %v586, %v602
    %v604 = vpop.f32.mrf.mxu0
    %v605 = vadd.f32 %v586, %v604
    %606 = vdwg.mxu0
    %607 = vmatpush.bf16.msra.mxu0 %v583
    %608 = vmatpush.bf16.msra.mxu0 %v582
    %609 = vmatpush.bf16.msra.mxu0 %v581
    %610 = vmatpush.bf16.msra.mxu0 %v580
    %611 = vmatpush.bf16.msra.mxu0 %v579
    %612 = vmatpush.bf16.msra.mxu0 %v578
    %613 = vmatpush.bf16.msra.mxu0 %v577
    %614 = vmatpush.bf16.msra.mxu0 %v576
    %615 = vmatmul.bf16.gmra.mxu0 %v533
    %v616 = vpop.f32.mrf.mxu0
    %v617 = vadd.f32 %v598, %v616
    %v618 = vpop.f32.mrf.mxu0
    %v619 = vadd.f32 %v600, %v618
    %620 = vmatmul.bf16.gmra.mxu0 %v535
    %v621 = vpop.f32.mrf.mxu0
    %v622 = vadd.f32 %v603, %v621
    %v623 = vpop.f32.mrf.mxu0
    %v624 = vadd.f32 %v605, %v623
    %625 = vdwg.mxu0
    %626 = vst [vmem:[#allocation10] sm:$0xff] %v617
    %627 = vst [vmem:[#allocation10 + $0x8] sm:$0xff] %v619
    %628 = vst [vmem:[#allocation10 + $0x10] sm:$0xff] %v622
    %629 = vst [vmem:[#allocation10 + $0x18] sm:$0xff] %v624
    // Predicated region
    $region38: #{tpu_custom_call.1} parent=1 // pred_check
      _
    $region39: #{tpu_custom_call.1} parent=1 // pred_check_branch
      %631 = sbr.rel (0) target = $region41
    $region40: #{tpu_custom_call.1} parent=1 // pred_region
      %633 = vsyncadd [#allocation4], 0
      %s634 = sshll.u32 [#allocation10], 4
      %s635 = int_to_ptr.vmem [resolvable:$true] %s634
      %s636 = sshll.u32 %s5, 4
      %s637 = int_to_ptr.hbm [resolvable:$true] %s636
      %642 = dma.vmem_to_hbm [thread:$0]  %s635, 512, %s637, [#allocation4], 128, 128, 8
    $region41: #{tpu_custom_call.1} parent=1 // pred_fallthru
      _
    // Predicated region
    $region42: #{tpu_custom_call.1} parent=1 // pred_check
      _
    $region43: #{tpu_custom_call.1} parent=1 // pred_check_branch
      %644 = sbr.rel (0) target = $region45
    $region44: #{tpu_custom_call.1} parent=1 // pred_region
      %646 = dma.done [#allocation4], 512
    $region45: #{tpu_custom_call.1} parent=1 // pred_fallthru
      _
    %647 = vsyncpa [#allocation3], 1
    %648 = vsyncpa [#allocation6], 1
    %649 = vsyncpa [#allocation9], 1
    %650 = vsyncpa [#allocation4], 1

</llo_original>
